<compile_context>
chip_gen: v7x
topology: tpu7x:2x2x1
jax: 0.10.0
libtpu: 0.0.40
codegen_flags: <defaults>
</compile_context>

<pallas_src>
import jax
import jax.numpy as jnp
from jax import lax
from jax.experimental import pallas as pl
from jax.experimental.pallas import tpu as pltpu


# ---------------------------------------------------------------------------
# Kernel
# ---------------------------------------------------------------------------
def _disc_kernel(xT_ref, w1_ref, wpack_ref, spack_ref, o_ref):
    # xT tile: (D, bt) bf16 -- fed straight to the MXU, batch on the lane axis.
    xT = xT_ref[...]                                    # (D, bt)  bf16
    w1 = w1_ref[...]                                    # (H, D)   bf16
    wp = wpack_ref[...]                                 # (2H, H)  f32   [W2; W3]
    sp = spack_ref[...]                                 # (H, 8)   f32   b1|b2|b3|[b4,0..]|w4|...
    H = w1.shape[0]

    b1 = sp[:, 0:1]                                     # (H, 1)
    b2 = sp[:, 1:2]
    b3 = sp[:, 2:3]
    b4 = sp[0:1, 3:4]                                   # (1, 1)
    w4 = sp[:, 4:5]                                     # (H, 1)  output-layer weights

    # Layer 1: (H, D) @ (D, bt) -> (H, bt), bf16 x bf16 -> f32 accumulate.
    # Canonical MXU orientation; no transpose of the big x tile.
    h = jnp.dot(w1, xT, preferred_element_type=jnp.float32)          # (H, bt)
    h = jnp.maximum(h + b1, 0.0)

    # Layers 2 / 3: tiny (H, H) @ (H, bt) f32 MXU matmuls.
    h = jnp.maximum(jnp.dot(wp[0:H, :], h, preferred_element_type=jnp.float32) + b2, 0.0)
    h = jnp.maximum(jnp.dot(wp[H:2 * H, :], h, preferred_element_type=jnp.float32) + b3, 0.0)

    # Output layer (H -> 1): VPU broadcast-mul + sublane reduce; result is a
    # lane-dense (1, bt) row.
    z = jnp.sum(h * w4, axis=0, keepdims=True) + b4                  # (1, bt)

    # Sigmoid: exp on the EUP, approx reciprocal on the EUP (no VPU divide).
    e = jnp.exp(-z)
    o_ref[...] = pl.reciprocal(1.0 + e, approx=True).astype(o_ref.dtype)


# ---------------------------------------------------------------------------
# Tiling policy
# ---------------------------------------------------------------------------
_VMEM_BUDGET_BYTES = 24 << 20          # conservative; we raise the scoped limit to 32 MiB
_VMEM_LIMIT_BYTES = 32 * 1024 * 1024   # safe on v5e (128 MiB), v6e (128 MiB), v7x (64 MiB)


def _fits_vmem(bt, D):
    x_dbuf = 2 * bt * D * 2            # (D, bt) bf16 x tile, double-buffered
    o_dbuf = 2 * bt * 4                # (1, bt) f32 output tile, double-buffered
    acts = 4 * 8 * bt * 4              # a handful of live (8, bt) f32 activations
    return x_dbuf + o_dbuf + acts <= _VMEM_BUDGET_BYTES


def _choose_tiling(B, D):
    """Pick (batch_tile, padded_batch): largest 128-multiple tile that fits the
    VMEM budget while keeping >=4 grid steps when possible (>=2, >=1 fallback)."""
    B128 = -(-B // 128) * 128
    cands = [bt for bt in (8192, 4096, 2048, 1024, 512, 256, 128)
             if bt <= B128 and _fits_vmem(bt, D)]
    if not cands:
        cands = [128]
    for min_steps in (4, 2, 1):
        for bt in cands:                               # largest tile first
            steps = -(-B128 // bt)
            if steps >= min_steps:
                return bt, steps * bt
    bt = cands[-1]
    return bt, -(-B128 // bt) * bt


# ---------------------------------------------------------------------------
# Parameter packing
# ---------------------------------------------------------------------------
def pack_params(params):
    """params: list of (W (out,in), b (out,)) in PyTorch layout for the 4 layers."""
    (w1, b1), (w2, b2), (w3, b3), (w4, b4) = params
    H = w2.shape[0]                                     # hidden width (8)
    w1 = w1.astype(jnp.bfloat16)                        # layer-1 weights: bf16 to MXU
    wpack = jnp.concatenate([w2, w3], axis=0).astype(jnp.float32)   # (2H, H) f32
    spack = jnp.zeros((H, 8), jnp.float32)
    spack = spack.at[:, 0].set(b1.astype(jnp.float32))
    spack = spack.at[:, 1].set(b2.astype(jnp.float32))
    spack = spack.at[:, 2].set(b3.astype(jnp.float32))
    spack = spack.at[0, 3].set(b4.astype(jnp.float32)[0])
    spack = spack.at[:, 4].set(w4.astype(jnp.float32)[0])           # (1,H) -> column
    return w1, wpack, spack


# ---------------------------------------------------------------------------
# Wrapper
# ---------------------------------------------------------------------------
def discriminator_forward(x, params, *, batch_tile=None):
    """x: (B, input_dim). params: [(W (out,in), b (out,))] * 4 (PyTorch layout)."""
    B, D = x.shape
    if batch_tile is None:
        bt, B_pad = _choose_tiling(B, D)
    else:
        bt = batch_tile
        assert bt % 128 == 0, "batch_tile must be a multiple of 128"
        B_pad = -(-B // bt) * bt

    w1, wpack, spack = pack_params(params)

    # Layout plumbing in the wrapper (not compute): bf16 cast + transpose to
    # (D, B) so the kernel's x block is lane-dense, then pad batch to B_pad.
    xT = x.astype(jnp.bfloat16).T                       # (D, B) bf16
    if B_pad != B:
        xT = jnp.pad(xT, ((0, 0), (0, B_pad - B)))

    grid = (B_pad // bt,)
    in_specs = [
        pl.BlockSpec((D, bt), lambda i: (0, i)),        # x: batch tiled on lane axis
        pl.BlockSpec(w1.shape, lambda i: (0, 0)),       # packed params: whole array,
        pl.BlockSpec(wpack.shape, lambda i: (0, 0)),    #   same block every grid step
        pl.BlockSpec(spack.shape, lambda i: (0, 0)),
    ]
    # Lane-dense output: batch on the lane axis; reshaped / sliced below.
    out_specs = pl.BlockSpec((1, bt), lambda i: (0, i))

    out = pl.pallas_call(
        _disc_kernel,
        out_shape=jax.ShapeDtypeStruct((1, B_pad), jnp.float32),
        grid_spec=pltpu.PrefetchScalarGridSpec(
            num_scalar_prefetch=0,
            grid=grid,
            in_specs=in_specs,
            out_specs=out_specs,
        ),
        compiler_params=pltpu.CompilerParams(
            dimension_semantics=("parallel",),
            vmem_limit_bytes=_VMEM_LIMIT_BYTES,
        ),
    )(xT, w1, wpack, spack)

    return out[0, :B].reshape(B, 1)


# ---------------------------------------------------------------------------
# Init + pure-JAX reference
# ---------------------------------------------------------------------------
def init_params(key, input_dim, hidden_output_dims=(8, 8, 8)):
    """nn.Linear-style init, PyTorch layout: W (out, in), b (out,)."""
    dims_in = [input_dim, *hidden_output_dims]
    dims_out = [*hidden_output_dims, 1]
    params = []
    for d_in, d_out in zip(dims_in, dims_out):
        key, kw, kb = jax.random.split(key, 3)
        bound = 1.0 / (float(d_in) ** 0.5)
        W = jax.random.uniform(kw, (d_out, d_in), jnp.float32, -bound, bound)
        b = jax.random.uniform(kb, (d_out,), jnp.float32, -bound, bound)
        params.append((W, b))
    return params


def reference_forward(x, params):
    h = x
    n = len(params)
    for i, (W, b) in enumerate(params):
        h = jnp.dot(h, W.T, precision=lax.Precision.HIGHEST) + b
        if i < n - 1:
            h = jnp.maximum(h, 0.0)
    return jax.nn.sigmoid(h)


# ---------------------------------------------------------------------------
# Smoke test
# ---------------------------------------------------------------------------
if __name__ == "__main__":
    key = jax.random.PRNGKey(0)
    kx, kp = jax.random.split(key)

    batch, input_dim = 500, 32          # non-multiple of 128: exercises pad + slice path
    x = jax.random.normal(kx, (batch, input_dim), jnp.float32)
    params = init_params(kp, input_dim, hidden_output_dims=(8, 8, 8))

    out = discriminator_forward(x, params)          # -> bt=128, 4 parallel grid steps
    out = jax.block_until_ready(out)

    # Reference mirrors the kernel's numeric contract: x and W1 rounded to bf16
    # (MXU feed), everything else f32.
    x_rt = x.astype(jnp.bfloat16).astype(jnp.float32)
    (w1, b1), *rest = params
    params_rt = [(w1.astype(jnp.bfloat16).astype(jnp.float32), b1), *rest]
    ref = reference_forward(x_rt, params_rt)

    assert out.shape == (batch, 1)
    assert jnp.allclose(out, ref, atol=2e-3, rtol=2e-3), float(jnp.max(jnp.abs(out - ref)))

    print("KERNEL_OK")
</pallas_src>

<mosaic_0001>
module attributes {stable_mosaic.version = 11 : i64} {
  func.func @_disc_kernel(%arg0: i32, %arg1: memref<32x128xbf16, #tpu.memory_space<vmem>>, %arg2: memref<8x32xbf16, #tpu.memory_space<vmem>>, %arg3: memref<16x8xf32, #tpu.memory_space<vmem>>, %arg4: memref<8x8xf32, #tpu.memory_space<vmem>>, %arg5: memref<1x128xf32, #tpu.memory_space<vmem>>) attributes {dimension_semantics = [#tpu.dimension_semantics<parallel>], iteration_bounds = array<i64: 4>, scalar_prefetch = 0 : i64, scratch_operands = 0 : i64, tpu.core_type = #tpu.core_type<tc>, window_params = [{transform_indices = @transform_0, window_bounds = array<i64: 32, 128>}, {pipeline_mode = #tpu.pipeline_mode<synchronous>, transform_indices = @transform_1, window_bounds = array<i64: 8, 32>}, {pipeline_mode = #tpu.pipeline_mode<synchronous>, transform_indices = @transform_2, window_bounds = array<i64: 16, 8>}, {pipeline_mode = #tpu.pipeline_mode<synchronous>, transform_indices = @transform_3, window_bounds = array<i64: 8, 8>}, {transform_indices = @transform_4, window_bounds = array<i64: 1, 128>}]} {
    %c0 = arith.constant 0 : index
    %c0_0 = arith.constant 0 : index
    %0 = vector.load %arg1[%c0, %c0_0] : memref<32x128xbf16, #tpu.memory_space<vmem>>, vector<32x128xbf16>
    %c0_1 = arith.constant 0 : index
    %c0_2 = arith.constant 0 : index
    %1 = vector.load %arg2[%c0_1, %c0_2] : memref<8x32xbf16, #tpu.memory_space<vmem>>, vector<8x32xbf16>
    %c0_3 = arith.constant 0 : index
    %c0_4 = arith.constant 0 : index
    %2 = vector.load %arg3[%c0_3, %c0_4] : memref<16x8xf32, #tpu.memory_space<vmem>>, vector<16x8xf32>
    %c0_5 = arith.constant 0 : index
    %c0_6 = arith.constant 0 : index
    %3 = vector.load %arg4[%c0_5, %c0_6] : memref<8x8xf32, #tpu.memory_space<vmem>>, vector<8x8xf32>
    %4 = vector.extract_strided_slice %3 {offsets = [0, 0], sizes = [8, 1], strides = [1, 1]} : vector<8x8xf32> to vector<8x1xf32>
    %5 = vector.extract_strided_slice %3 {offsets = [0, 1], sizes = [8, 1], strides = [1, 1]} : vector<8x8xf32> to vector<8x1xf32>
    %6 = vector.extract_strided_slice %3 {offsets = [0, 2], sizes = [8, 1], strides = [1, 1]} : vector<8x8xf32> to vector<8x1xf32>
    %7 = vector.extract_strided_slice %3 {offsets = [0, 3], sizes = [1, 1], strides = [1, 1]} : vector<8x8xf32> to vector<1x1xf32>
    %8 = vector.extract_strided_slice %3 {offsets = [0, 4], sizes = [8, 1], strides = [1, 1]} : vector<8x8xf32> to vector<8x1xf32>
    %cst = arith.constant dense<0.000000e+00> : vector<8x128xf32>
    %9 = tpu.matmul %1, %0, %cst {dimension_numbers = #tpu.dot_dimension_numbers<[1], [0], [0], [1], [0, 0, 1, 1], [], []>} : vector<8x32xbf16>, vector<32x128xbf16>, vector<8x128xf32> -> vector<8x128xf32>
    %10 = vector.broadcast %4 : vector<8x1xf32> to vector<8x128xf32>
    %11 = arith.addf %9, %10 : vector<8x128xf32>
    %cst_7 = arith.constant 0.000000e+00 : f32
    %12 = vector.broadcast %cst_7 : f32 to vector<8x128xf32>
    %13 = arith.maximumf %11, %12 : vector<8x128xf32>
    %14 = vector.extract_strided_slice %2 {offsets = [0, 0], sizes = [8, 8], strides = [1, 1]} : vector<16x8xf32> to vector<8x8xf32>
    %cst_8 = arith.constant dense<0.000000e+00> : vector<8x128xf32>
    %15 = tpu.matmul %14, %13, %cst_8 {dimension_numbers = #tpu.dot_dimension_numbers<[1], [0], [0], [1], [0, 0, 1, 1], [], []>} : vector<8x8xf32>, vector<8x128xf32>, vector<8x128xf32> -> vector<8x128xf32>
    %16 = vector.broadcast %5 : vector<8x1xf32> to vector<8x128xf32>
    %17 = arith.addf %15, %16 : vector<8x128xf32>
    %cst_9 = arith.constant 0.000000e+00 : f32
    %18 = vector.broadcast %cst_9 : f32 to vector<8x128xf32>
    %19 = arith.maximumf %17, %18 : vector<8x128xf32>
    %20 = vector.extract_strided_slice %2 {offsets = [8, 0], sizes = [8, 8], strides = [1, 1]} : vector<16x8xf32> to vector<8x8xf32>
    %cst_10 = arith.constant dense<0.000000e+00> : vector<8x128xf32>
    %21 = tpu.matmul %20, %19, %cst_10 {dimension_numbers = #tpu.dot_dimension_numbers<[1], [0], [0], [1], [0, 0, 1, 1], [], []>} : vector<8x8xf32>, vector<8x128xf32>, vector<8x128xf32> -> vector<8x128xf32>
    %22 = vector.broadcast %6 : vector<8x1xf32> to vector<8x128xf32>
    %23 = arith.addf %21, %22 : vector<8x128xf32>
    %cst_11 = arith.constant 0.000000e+00 : f32
    %24 = vector.broadcast %cst_11 : f32 to vector<8x128xf32>
    %25 = arith.maximumf %23, %24 : vector<8x128xf32>
    %26 = vector.broadcast %8 : vector<8x1xf32> to vector<8x128xf32>
    %27 = arith.mulf %25, %26 : vector<8x128xf32>
    %cst_12 = arith.constant dense<0.000000e+00> : vector<128xf32>
    %28 = vector.multi_reduction <add>, %27, %cst_12 [0] : vector<8x128xf32> to vector<128xf32>
    %29 = vector.shape_cast %28 : vector<128xf32> to vector<1x128xf32>
    %30 = vector.broadcast %7 : vector<1x1xf32> to vector<1x128xf32>
    %31 = arith.addf %29, %30 : vector<1x128xf32>
    %cst_13 = arith.constant 0.000000e+00 : f32
    %32 = vector.broadcast %cst_13 : f32 to vector<1x128xf32>
    %33 = arith.subf %32, %31 : vector<1x128xf32>
    %34 = math.exp %33 : vector<1x128xf32>
    %cst_14 = arith.constant 1.000000e+00 : f32
    %35 = vector.broadcast %cst_14 : f32 to vector<1x128xf32>
    %36 = arith.addf %35, %34 : vector<1x128xf32>
    %37 = tpu.reciprocal %36 {approx = true} : vector<1x128xf32> -> vector<1x128xf32>
    %c0_15 = arith.constant 0 : index
    %c0_16 = arith.constant 0 : index
    %38 = vector.load %arg5[%c0_15, %c0_16] : memref<1x128xf32, #tpu.memory_space<vmem>>, vector<1x128xf32>
    tpu.vector_store %arg5[%c0_15, %c0_16], %37 {strides = array<i32>} : memref<1x128xf32, #tpu.memory_space<vmem>>, vector<1x128xf32>,
    return
  }
  func.func @transform_0(%arg0: i32) -> (i32, i32) {
    %c0_i32 = arith.constant 0 : i32
    %c0_i32_0 = arith.constant 0 : i32
    return %c0_i32, %arg0 : i32, i32
  }
  func.func @transform_1(%arg0: i32) -> (i32, i32) {
    %c0_i32 = arith.constant 0 : i32
    %c0_i32_0 = arith.constant 0 : i32
    %c0_i32_1 = arith.constant 0 : i32
    return %c0_i32, %c0_i32_0 : i32, i32
  }
  func.func @transform_2(%arg0: i32) -> (i32, i32) {
    %c0_i32 = arith.constant 0 : i32
    %c0_i32_0 = arith.constant 0 : i32
    %c0_i32_1 = arith.constant 0 : i32
    return %c0_i32, %c0_i32_0 : i32, i32
  }
  func.func @transform_3(%arg0: i32) -> (i32, i32) {
    %c0_i32 = arith.constant 0 : i32
    %c0_i32_0 = arith.constant 0 : i32
    %c0_i32_1 = arith.constant 0 : i32
    return %c0_i32, %c0_i32_0 : i32, i32
  }
  func.func @transform_4(%arg0: i32) -> (i32, i32) {
    %c0_i32 = arith.constant 0 : i32
    %c0_i32_0 = arith.constant 0 : i32
    return %c0_i32, %arg0 : i32, i32
  }
}

</mosaic_0001>

<llo_original>
// kernel: tpu_custom_call.1
$region0: #{tpu_custom_call.1}
  #allocation0 [shape = 'u32[]', space=smem, size = 0x4, offset = 0x4, fixed_abs, tag = 'smem constant byte address 0x4 - core index']
  #allocation1 [shape = 'u32[144,128]{1,0:T(1,128)}', space=vmem, size = 0x12000, scoped, tag = 'internal scratch']
  %s0 = inlined_call_operand.hbm [shape: bf16[32,512], index: 0, kind: input, shape index: {}]
  %s1 = inlined_call_operand.vmem [shape: bf16[8,32], index: 1, kind: input, shape index: {}]
  %s2 = inlined_call_operand.vmem [shape: f32[16,8], index: 2, kind: input, shape index: {}]
  %s3 = inlined_call_operand.vmem [shape: f32[8,8], index: 3, kind: input, shape index: {}]
  %s4 = inlined_call_operand.hbm [shape: f32[1,512], index: 4, kind: output, shape index: {}]
  %s5 = sld [smem:[#allocation0]]
  $region53: #{tpu_custom_call.1} parent=0
    _
  %s7 = ssub.s32 1, %s5
  %s8 = scalar_select 0, %s7, %s5
  $region1: #{tpu_custom_call.1} parent=0
    #allocation2 [shape = 'u8[16384]{0}', space=vmem, size = 0x4000, scoped, tag = 'input window, operand 0']
    #allocation3 [shape = 's32[2]{0}', space=sflag, size = 0x8, scoped, tag = 'scoped memory for tpu_custom_call.1']
    #allocation4 [shape = 's32[2]{0}', space=sflag, size = 0x8, scoped, tag = 'scoped memory for tpu_custom_call.1']
    #allocation5 [shape = 'u8[1024]{0}', space=vmem, size = 0x400, scoped, tag = 'output window, operand 0']
    %9 = vsyncpa [#allocation3], 0
    %s10 = scalar_lea.sflag [#allocation3], 1
    %11 = vsyncpa %s10, 0
    %12 = vsyncpa [#allocation4], 0
    %s13 = scalar_lea.sflag [#allocation4], 1
    %14 = vsyncpa %s13, 0
    loop: start=0, step=1, limit=6
    $region2: #{tpu_custom_call.1} parent=1 // loop_pre_header
      _
    $region3: #{tpu_custom_call.1} parent=1 // loop_header
      %s16 = sphi 0, %s20
      %p17 = scmp.ge.s32.totalorder %s16, 6
      %s26 = sphi 0, %s28
      %s29 = sphi 0, %s26
      %s30 = sphi 0, %s29
      %s46 = sphi 0, %s30
      %s50 = sphi 0, %s50
      %s52 = sphi 0, %s50
      %s53 = sphi 0, %s52
      %s67 = sphi 0, %s53
      %s71 = sphi 0, %s71
      %s73 = sphi 0, %s71
      %s74 = sphi 0, %s73
      %s88 = sphi 0, %s74
      %s92 = sphi 0, %s92
      %s94 = sphi 0, %s92
      %s95 = sphi 0, %s94
      %s109 = sphi 0, %s95
      %s115 = sphi 0, %s117
      %s118 = sphi 0, %s115
      %s119 = sphi 0, %s118
      %s135 = sphi 0, %s119
    $region4: #{tpu_custom_call.1} parent=1 // loop_header_branch
      %19 = sbr.rel (%p17) target = $region8
    $region5: #{tpu_custom_call.1} parent=1 // loop_body
      %s21 = ssub.s32 %s16, 1
      %s22 = ssub.s32 %s16, 2
      %s23 = sadd.s32 %s16, 1
      %s24 = ssub.s32 %s16, %s23
      %p25 = scmp.eq.s32.totalorder %s24, 0
      %s27 = sadd.s32 %s26, 1
      %s28 = scalar_select %p25, %s26, %s27
      %p31 = pneg %p25
      %p32 = scmp.eq.s32.totalorder %s16, 3
      %p33 = por %p31, %p32
      %p34 = scmp.ne.s32.totalorder %s26, %s29
      %p35 = scmp.eq.s32.totalorder %s16, 0
      %p36 = por %p34, %p35
      %p37 = scmp.ne.s32.totalorder %s26, %s29
      %p38 = scmp.eq.s32.totalorder %s21, 3
      %p39 = por %p37, %p38
      %p40 = scmp.ne.s32.totalorder %s29, %s30
      %p41 = scmp.eq.s32.totalorder %s21, 0
      %p42 = por %p40, %p41
      %p43 = scmp.ne.s32.totalorder %s29, %s30
      %p44 = scmp.eq.s32.totalorder %s22, 3
      %p45 = por %p43, %p44
      %p47 = scmp.ne.s32.totalorder %s30, %s46
      %p48 = scmp.eq.s32.totalorder %s22, 0
      %p49 = por %p47, %p48
      %s51 = sadd.s32 %s50, 1
      %p54 = scmp.eq.s32.totalorder %s16, 3
      %p55 = scmp.ne.s32.totalorder %s50, %s52
      %p56 = scmp.eq.s32.totalorder %s16, 0
      %p57 = por %p55, %p56
      %p58 = scmp.ne.s32.totalorder %s50, %s52
      %p59 = scmp.eq.s32.totalorder %s21, 3
      %p60 = por %p58, %p59
      %p61 = scmp.ne.s32.totalorder %s52, %s53
      %p62 = scmp.eq.s32.totalorder %s21, 0
      %p63 = por %p61, %p62
      %p64 = scmp.ne.s32.totalorder %s52, %s53
      %p65 = scmp.eq.s32.totalorder %s22, 3
      %p66 = por %p64, %p65
      %p68 = scmp.ne.s32.totalorder %s53, %s67
      %p69 = scmp.eq.s32.totalorder %s22, 0
      %p70 = por %p68, %p69
      %s72 = sadd.s32 %s71, 1
      %p75 = scmp.eq.s32.totalorder %s16, 3
      %p76 = scmp.ne.s32.totalorder %s71, %s73
      %p77 = scmp.eq.s32.totalorder %s16, 0
      %p78 = por %p76, %p77
      %p79 = scmp.ne.s32.totalorder %s71, %s73
      %p80 = scmp.eq.s32.totalorder %s21, 3
      %p81 = por %p79, %p80
      %p82 = scmp.ne.s32.totalorder %s73, %s74
      %p83 = scmp.eq.s32.totalorder %s21, 0
      %p84 = por %p82, %p83
      %p85 = scmp.ne.s32.totalorder %s73, %s74
      %p86 = scmp.eq.s32.totalorder %s22, 3
      %p87 = por %p85, %p86
      %p89 = scmp.ne.s32.totalorder %s74, %s88
      %p90 = scmp.eq.s32.totalorder %s22, 0
      %p91 = por %p89, %p90
      %s93 = sadd.s32 %s92, 1
      %p96 = scmp.eq.s32.totalorder %s16, 3
      %p97 = scmp.ne.s32.totalorder %s92, %s94
      %p98 = scmp.eq.s32.totalorder %s16, 0
      %p99 = por %p97, %p98
      %p100 = scmp.ne.s32.totalorder %s92, %s94
      %p101 = scmp.eq.s32.totalorder %s21, 3
      %p102 = por %p100, %p101
      %p103 = scmp.ne.s32.totalorder %s94, %s95
      %p104 = scmp.eq.s32.totalorder %s21, 0
      %p105 = por %p103, %p104
      %p106 = scmp.ne.s32.totalorder %s94, %s95
      %p107 = scmp.eq.s32.totalorder %s22, 3
      %p108 = por %p106, %p107
      %p110 = scmp.ne.s32.totalorder %s95, %s109
      %p111 = scmp.eq.s32.totalorder %s22, 0
      %p112 = por %p110, %p111
      %s113 = ssub.s32 %s16, %s23
      %p114 = scmp.eq.s32.totalorder %s113, 0
      %s116 = sadd.s32 %s115, 1
      %s117 = scalar_select %p114, %s115, %s116
      %p120 = pneg %p114
      %p121 = scmp.eq.s32.totalorder %s16, 3
      %p122 = por %p120, %p121
      %p123 = scmp.ne.s32.totalorder %s115, %s118
      %p124 = scmp.eq.s32.totalorder %s16, 0
      %p125 = por %p123, %p124
      %p126 = scmp.ne.s32.totalorder %s115, %s118
      %p127 = scmp.eq.s32.totalorder %s21, 3
      %p128 = por %p126, %p127
      %p129 = scmp.ne.s32.totalorder %s118, %s119
      %p130 = scmp.eq.s32.totalorder %s21, 0
      %p131 = por %p129, %p130
      %p132 = scmp.ne.s32.totalorder %s118, %s119
      %p133 = scmp.eq.s32.totalorder %s22, 3
      %p134 = por %p132, %p133
      %p136 = scmp.ne.s32.totalorder %s119, %s135
      %p137 = scmp.eq.s32.totalorder %s22, 0
      %p138 = por %p136, %p137
      %p139 = scmp.le.s32.totalorder 1, %s16
      %p140 = scmp.lt.s32.totalorder %s16, 5
      %p141 = pnand %p139, %p140
      %p142 = pneg %p141
      // Predicated region
      $region9: #{tpu_custom_call.1} parent=5 // pred_check
        _
      $region10: #{tpu_custom_call.1} parent=5 // pred_check_branch
        %144 = sbr.rel (%p141) target = $region12
      $region11: #{tpu_custom_call.1} parent=5 // pred_region
        %s145 = ssub.s32 %s16, 1
        // Predicated region
        $region13: #{tpu_custom_call.1} parent=11 // pred_check
          %p146 = pneg %p63
        $region14: #{tpu_custom_call.1} parent=11 // pred_check_branch
          %148 = sbr.rel (%p146) target = $region16
        $region15: #{tpu_custom_call.1} parent=11 // pred_region
          _
        $region16: #{tpu_custom_call.1} parent=11 // pred_fallthru
          _
        // Predicated region
        $region17: #{tpu_custom_call.1} parent=11 // pred_check
          %p149 = pneg %p84
        $region18: #{tpu_custom_call.1} parent=11 // pred_check_branch
          %151 = sbr.rel (%p149) target = $region20
        $region19: #{tpu_custom_call.1} parent=11 // pred_region
          _
        $region20: #{tpu_custom_call.1} parent=11 // pred_fallthru
          _
        // Predicated region
        $region21: #{tpu_custom_call.1} parent=11 // pred_check
          %p152 = pneg %p105
        $region22: #{tpu_custom_call.1} parent=11 // pred_check_branch
          %154 = sbr.rel (%p152) target = $region24
        $region23: #{tpu_custom_call.1} parent=11 // pred_region
          _
        $region24: #{tpu_custom_call.1} parent=11 // pred_fallthru
          _
      $region12: #{tpu_custom_call.1} parent=5 // pred_fallthru
        _
      %p155 = scmp.lt.s32.totalorder %s16, 4
      // Predicated region
      $region25: #{tpu_custom_call.1} parent=5 // pred_check
        %p156 = pneg %p155
      $region26: #{tpu_custom_call.1} parent=5 // pred_check_branch
        %158 = sbr.rel (%p156) target = $region28
      $region27: #{tpu_custom_call.1} parent=5 // pred_region
        // Predicated region
        $region29: #{tpu_custom_call.1} parent=27 // pred_check
          %p159 = pneg %p36
        $region30: #{tpu_custom_call.1} parent=27 // pred_check_branch
          %161 = sbr.rel (%p159) target = $region32
        $region31: #{tpu_custom_call.1} parent=27 // pred_region
          %s162 = sand.u32 %s26, 1
          %s163 = scalar_lea.sflag [#allocation3], %s162
          %s164 = sand.u32 %s26, 1
          %s165 = smul.addr %s164, 16
          %s166 = scalar_lea.vmem [#allocation2], %s165
          %s168 = ssub.s32 256, 256
          %169 = vsyncadd %s163, %s168
          %s170 = smul.addr %s16, 64
          %s171 = scalar_lea.hbm %s0, %s170
          %s172 = sshll.u32 %s166, 4
          %s173 = int_to_ptr.vmem [resolvable:$true] %s172
          %178 = dma.hbm_to_vmem [thread:$0]  %s171, 256, %s173, %s163, 256, 64, 4
        $region32: #{tpu_custom_call.1} parent=27 // pred_fallthru
          _
      $region28: #{tpu_custom_call.1} parent=5 // pred_fallthru
        _
      %p179 = scmp.le.s32.totalorder 1, %s16
      %p180 = scmp.lt.s32.totalorder %s16, 5
      %p181 = pnand %p179, %p180
      %p182 = pneg %p181
      // Predicated region
      $region33: #{tpu_custom_call.1} parent=5 // pred_check
        _
      $region34: #{tpu_custom_call.1} parent=5 // pred_check_branch
        %184 = sbr.rel (%p181) target = $region36
      $region35: #{tpu_custom_call.1} parent=5 // pred_region
        %s185 = ssub.s32 %s16, 1
        %s186 = sand.u32 %s29, 1
        %s187 = scalar_lea.sflag [#allocation3], %s186
        %s188 = sand.u32 %s29, 1
        %s189 = smul.addr %s188, 16
        %s190 = scalar_lea.vmem [#allocation2], %s189
        // Predicated region
        $region37: #{tpu_custom_call.1} parent=35 // pred_check
          %p191 = pneg %p42
        $region38: #{tpu_custom_call.1} parent=35 // pred_check_branch
          %193 = sbr.rel (%p191) target = $region40
        $region39: #{tpu_custom_call.1} parent=35 // pred_region
          %194 = dma.done %s187, 256
        $region40: #{tpu_custom_call.1} parent=35 // pred_fallthru
          _
        %s195 = sand.u32 %s29, 1
        %s196 = scalar_lea.sflag [#allocation3], %s195
        %s197 = sand.u32 %s29, 1
        %s198 = smul.addr %s197, 16
        %s199 = scalar_lea.vmem [#allocation2], %s198
        %p200 = pneg %p42
        %p201 = pneg %p39
        %p202 = pneg %p63
        %p203 = pneg %p60
        %p204 = pneg %p84
        %p205 = pneg %p81
        %p206 = pneg %p105
        %p207 = pneg %p102
        %p208 = pneg %p131
        %p209 = pneg %p128
        %s210 = sand.u32 %s118, 1
        %s211 = scalar_lea.sflag [#allocation4], %s210
        %s212 = sand.u32 %s118, 1
        %s213 = scalar_lea.vmem [#allocation5], %s212
        %v215 = vld [vmem:[%s190] sm:$0xf]
        %v216 = vld [vmem:[%s190 + $0x4] sm:$0xf]
        %v217 = vld [vmem:[%s190 + $0x8] sm:$0xf]
        %v218 = vld [vmem:[%s190 + $0xc] sm:$0xf]
        %v219 = vld [vmem:[%s1] sm:$0xf]
        %v220 = vld [vmem:[%s2] sm:$0xff]
        %v221 = vld [vmem:[%s2 + $0x8] sm:$0xff]
        %v222 = vld [vmem:[%s3] sm:$0xff]
        %224 = vset.pattern.permute.xlu0 0
        %225 = vperm.xlu0 %224, %v222
        %v226 = vpop.permute.xlu0 %225
        %v232 = vunpack.c.l.b16 %v215
        %v233 = vunpack.c.l.b16 %v216
        %v234 = vunpack.c.l.b16 %v217
        %v235 = vunpack.c.l.b16 %v218
        %v236 = vpack.c.b16 %v233, %v232
        %v237 = vpack.c.b16 %v235, %v234
        %vm240 = vcmask 261120
        %v242 = vsel %vm240, %v219, 0
        %244 = vmatprep.subr.bf16.mxu0 0
        %245 = vmatpush1.bf16.msra.mxu0 %v236
        %246 = vmatprep.subr.bf16.mxu0 0
        %247 = vmatpush1.bf16.msra.mxu0 %v237
        %248 = vmatprep.subr.bf16.mxu0 0
        %249 = vmatpush1.bf16.msra.mxu0 0
        %250 = vmatprep.subr.bf16.mxu0 0
        %251 = vmatpush1.bf16.msra.mxu0 0
        %252 = vmatprep.subr.bf16.mxu0 0
        %253 = vmatpush1.bf16.msra.mxu0 0
        %254 = vmatprep.subr.bf16.mxu0 0
        %255 = vmatpush1.bf16.msra.mxu0 0
        %256 = vmatprep.subr.bf16.mxu0 0
        %257 = vmatpush1.bf16.msra.mxu0 0
        %258 = vmatprep.subr.bf16.mxu0 0
        %259 = vmatpush1.bf16.msra.mxu0 0
        %260 = vmatprep.subr.bf16.mxu0 0
        %261 = vmatpush1.bf16.msra.mxu0 0
        %262 = vmatprep.subr.bf16.mxu0 0
        %263 = vmatpush1.bf16.msra.mxu0 0
        %264 = vmatprep.subr.bf16.mxu0 0
        %265 = vmatpush1.bf16.msra.mxu0 0
        %266 = vmatprep.subr.bf16.mxu0 0
        %267 = vmatpush1.bf16.msra.mxu0 0
        %268 = vmatprep.subr.bf16.mxu0 0
        %269 = vmatpush1.bf16.msra.mxu0 0
        %270 = vmatprep.subr.bf16.mxu0 0
        %271 = vmatpush1.bf16.msra.mxu0 0
        %272 = vmatprep.subr.bf16.mxu0 0
        %273 = vmatpush1.bf16.msra.mxu0 0
        %274 = vmatprep.subr.bf16.mxu0 0
        %275 = vmatpush1.bf16.msra.mxu0 0
        %276 = vmatprep.mubr.bf16.mxu0 0
        %277 = vmatmul.mubr.bf16.gmra.mrb[0].mxu0 %v242
        %v278 = vpop.f32.mrb[0].mxu0
        %v279 = vadd.f32 %v226, %v278
        %v280 = vpop.f32.mrb[0].mxu0
        %v281 = vpop.f32.mrb[0].mxu0
        %v282 = vpop.f32.mrb[0].mxu0
        %283 = vdwg.mxu0
        %v284 = vmax.f32 %v279, 0.0
        %285 = vset.pattern.permute.xlu0 1
        %286 = vperm.xlu0 %285, %v222
        %v287 = vpop.permute.xlu0 %286
        %vm289 = vcmask 64512
        %v291 = vsel %vm289, %v220, 0
        %293 = vmatprep.subr.mxu0 0.0
        %294 = vmatpush1.msra.mxu0 %v284
        %295 = vmatprep.subr.mxu0 0.0
        %296 = vmatpush1.msra.mxu0 0.0
        %297 = vmatprep.subr.mxu0 0.0
        %298 = vmatpush1.msra.mxu0 0.0
        %299 = vmatprep.subr.mxu0 0.0
        %300 = vmatpush1.msra.mxu0 0.0
        %301 = vmatprep.subr.mxu0 0.0
        %302 = vmatpush1.msra.mxu0 0.0
        %303 = vmatprep.subr.mxu0 0.0
        %304 = vmatpush1.msra.mxu0 0.0
        %305 = vmatprep.subr.mxu0 0.0
        %306 = vmatpush1.msra.mxu0 0.0
        %307 = vmatprep.subr.mxu0 0.0
        %308 = vmatpush1.msra.mxu0 0.0
        %309 = vmatprep.subr.mxu0 0.0
        %310 = vmatpush1.msra.mxu0 0.0
        %311 = vmatprep.subr.mxu0 0.0
        %312 = vmatpush1.msra.mxu0 0.0
        %313 = vmatprep.subr.mxu0 0.0
        %314 = vmatpush1.msra.mxu0 0.0
        %315 = vmatprep.subr.mxu0 0.0
        %316 = vmatpush1.msra.mxu0 0.0
        %317 = vmatprep.subr.mxu0 0.0
        %318 = vmatpush1.msra.mxu0 0.0
        %319 = vmatprep.subr.mxu0 0.0
        %320 = vmatpush1.msra.mxu0 0.0
        %321 = vmatprep.subr.mxu0 0.0
        %322 = vmatpush1.msra.mxu0 0.0
        %323 = vmatprep.subr.mxu0 0.0
        %324 = vmatpush1.msra.mxu0 0.0
        %325 = vmatprep.subr.mxu0 0.0
        %326 = vmatpush1.msra.mxu0 0.0
        %327 = vmatprep.subr.mxu0 0.0
        %328 = vmatpush1.msra.mxu0 0.0
        %329 = vmatprep.subr.mxu0 0.0
        %330 = vmatpush1.msra.mxu0 0.0
        %331 = vmatprep.subr.mxu0 0.0
        %332 = vmatpush1.msra.mxu0 0.0
        %333 = vmatprep.subr.mxu0 0.0
        %334 = vmatpush1.msra.mxu0 0.0
        %335 = vmatprep.subr.mxu0 0.0
        %336 = vmatpush1.msra.mxu0 0.0
        %337 = vmatprep.subr.mxu0 0.0
        %338 = vmatpush1.msra.mxu0 0.0
        %339 = vmatprep.subr.mxu0 0.0
        %340 = vmatpush1.msra.mxu0 0.0
        %341 = vmatprep.subr.mxu0 0.0
        %342 = vmatpush1.msra.mxu0 0.0
        %343 = vmatprep.subr.mxu0 0.0
        %344 = vmatpush1.msra.mxu0 0.0
        %345 = vmatprep.subr.mxu0 0.0
        %346 = vmatpush1.msra.mxu0 0.0
        %347 = vmatprep.subr.mxu0 0.0
        %348 = vmatpush1.msra.mxu0 0.0
        %349 = vmatprep.subr.mxu0 0.0
        %350 = vmatpush1.msra.mxu0 0.0
        %351 = vmatprep.subr.mxu0 0.0
        %352 = vmatpush1.msra.mxu0 0.0
        %353 = vmatprep.subr.mxu0 0.0
        %354 = vmatpush1.msra.mxu0 0.0
        %355 = vmatprep.subr.mxu0 0.0
        %356 = vmatpush1.msra.mxu0 0.0
        %357 = vmatprep.mubr.f32.mxu0 0.0
        %358 = vmatmul.mubr.f32.gmra.mrb[0].mxu0 %v291
        %v359 = vpop.f32.mrb[0].mxu0
        %v360 = vadd.f32 %v287, %v359
        %v361 = vpop.f32.mrb[0].mxu0
        %362 = vdwg.mxu0
        %v363 = vmax.f32 %v360, 0.0
        %364 = vset.pattern.permute.xlu0 2
        %365 = vperm.xlu0 %364, %v222
        %v366 = vpop.permute.xlu0 %365
        %v369 = vsel %vm289, %v221, 0
        %371 = vmatprep.subr.mxu0 0.0
        %372 = vmatpush1.msra.mxu0 %v363
        %373 = vmatprep.subr.mxu0 0.0
        %374 = vmatpush1.msra.mxu0 0.0
        %375 = vmatprep.subr.mxu0 0.0
        %376 = vmatpush1.msra.mxu0 0.0
        %377 = vmatprep.subr.mxu0 0.0
        %378 = vmatpush1.msra.mxu0 0.0
        %379 = vmatprep.subr.mxu0 0.0
        %380 = vmatpush1.msra.mxu0 0.0
        %381 = vmatprep.subr.mxu0 0.0
        %382 = vmatpush1.msra.mxu0 0.0
        %383 = vmatprep.subr.mxu0 0.0
        %384 = vmatpush1.msra.mxu0 0.0
        %385 = vmatprep.subr.mxu0 0.0
        %386 = vmatpush1.msra.mxu0 0.0
        %387 = vmatprep.subr.mxu0 0.0
        %388 = vmatpush1.msra.mxu0 0.0
        %389 = vmatprep.subr.mxu0 0.0
        %390 = vmatpush1.msra.mxu0 0.0
        %391 = vmatprep.subr.mxu0 0.0
        %392 = vmatpush1.msra.mxu0 0.0
        %393 = vmatprep.subr.mxu0 0.0
        %394 = vmatpush1.msra.mxu0 0.0
        %395 = vmatprep.subr.mxu0 0.0
        %396 = vmatpush1.msra.mxu0 0.0
        %397 = vmatprep.subr.mxu0 0.0
        %398 = vmatpush1.msra.mxu0 0.0
        %399 = vmatprep.subr.mxu0 0.0
        %400 = vmatpush1.msra.mxu0 0.0
        %401 = vmatprep.subr.mxu0 0.0
        %402 = vmatpush1.msra.mxu0 0.0
        %403 = vmatprep.subr.mxu0 0.0
        %404 = vmatpush1.msra.mxu0 0.0
        %405 = vmatprep.subr.mxu0 0.0
        %406 = vmatpush1.msra.mxu0 0.0
        %407 = vmatprep.subr.mxu0 0.0
        %408 = vmatpush1.msra.mxu0 0.0
        %409 = vmatprep.subr.mxu0 0.0
        %410 = vmatpush1.msra.mxu0 0.0
        %411 = vmatprep.subr.mxu0 0.0
        %412 = vmatpush1.msra.mxu0 0.0
        %413 = vmatprep.subr.mxu0 0.0
        %414 = vmatpush1.msra.mxu0 0.0
        %415 = vmatprep.subr.mxu0 0.0
        %416 = vmatpush1.msra.mxu0 0.0
        %417 = vmatprep.subr.mxu0 0.0
        %418 = vmatpush1.msra.mxu0 0.0
        %419 = vmatprep.subr.mxu0 0.0
        %420 = vmatpush1.msra.mxu0 0.0
        %421 = vmatprep.subr.mxu0 0.0
        %422 = vmatpush1.msra.mxu0 0.0
        %423 = vmatprep.subr.mxu0 0.0
        %424 = vmatpush1.msra.mxu0 0.0
        %425 = vmatprep.subr.mxu0 0.0
        %426 = vmatpush1.msra.mxu0 0.0
        %427 = vmatprep.subr.mxu0 0.0
        %428 = vmatpush1.msra.mxu0 0.0
        %429 = vmatprep.subr.mxu0 0.0
        %430 = vmatpush1.msra.mxu0 0.0
        %431 = vmatprep.subr.mxu0 0.0
        %432 = vmatpush1.msra.mxu0 0.0
        %433 = vmatprep.subr.mxu0 0.0
        %434 = vmatpush1.msra.mxu0 0.0
        %435 = vmatprep.mubr.f32.mxu0 0.0
        %436 = vmatmul.mubr.f32.gmra.mrb[0].mxu0 %v369
        %v437 = vpop.f32.mrb[0].mxu0
        %v438 = vadd.f32 %v366, %v437
        %v439 = vpop.f32.mrb[0].mxu0
        %440 = vdwg.mxu0
        %v441 = vmax.f32 %v438, 0.0
        %442 = vset.pattern.permute.xlu0 4
        %443 = vperm.xlu0 %442, %v222
        %v444 = vpop.permute.xlu0 %443
        %v446 = vmul.f32 %v441, %v444
        %v447 = vrot.slane %v446, 4
        %v448 = vadd.f32 %v446, %v447
        %v449 = vrot.slane %v448, 2
        %v450 = vadd.f32 %v448, %v449
        %v451 = vrot.slane %v450, 1
        %v452 = vadd.f32 %v450, %v451
        %453 = vset.pattern.permute.xlu0 3
        %454 = vperm.xlu0 %453, %v222
        %v455 = vpop.permute.xlu0 %454
        %v457 = vadd.f32 %v452, %v455
        %v458 = vsub.f32 0.0, %v457
        %v459 = vmul.f32 %v458, 1.442695
        %v460 = vpow.pop %v459
        %v461 = vadd.f32 %v460, 1.0
        %v462 = vrcp.pop %v461
        %463 = vst [vmem:[%s213] sm:$0x1] %v462
        %s464 = sand.u32 %s118, 1
        %s465 = scalar_lea.sflag [#allocation4], %s464
        %s466 = sand.u32 %s118, 1
        %s467 = scalar_lea.vmem [#allocation5], %s466
        // Predicated region
        $region41: #{tpu_custom_call.1} parent=35 // pred_check
          %p468 = pneg %p128
        $region42: #{tpu_custom_call.1} parent=35 // pred_check_branch
          %470 = sbr.rel (%p468) target = $region44
        $region43: #{tpu_custom_call.1} parent=35 // pred_region
          %s472 = ssub.s32 16, 16
          %473 = vsyncadd %s465, %s472
          %s474 = smul.addr %s21, 16
          %s475 = scalar_lea.hbm %s4, %s474
          %s477 = sshll.u32 %s467, 4
          %s478 = int_to_ptr.vmem [resolvable:$true] %s477
          %480 = dma.vmem_to_hbm [thread:$0]  %s478, 16, %s475, %s465
        $region44: #{tpu_custom_call.1} parent=35 // pred_fallthru
          _
      $region36: #{tpu_custom_call.1} parent=5 // pred_fallthru
        _
      %p481 = scmp.le.s32.totalorder 2, %s16
      // Predicated region
      $region45: #{tpu_custom_call.1} parent=5 // pred_check
        %p482 = pneg %p481
      $region46: #{tpu_custom_call.1} parent=5 // pred_check_branch
        %484 = sbr.rel (%p482) target = $region48
      $region47: #{tpu_custom_call.1} parent=5 // pred_region
        %s485 = ssub.s32 %s16, 2
        // Predicated region
        $region49: #{tpu_custom_call.1} parent=47 // pred_check
          %p486 = pneg %p134
        $region50: #{tpu_custom_call.1} parent=47 // pred_check_branch
          %488 = sbr.rel (%p486) target = $region52
        $region51: #{tpu_custom_call.1} parent=47 // pred_region
          %s489 = sand.u32 %s119, 1
          %s490 = scalar_lea.sflag [#allocation4], %s489
          %s491 = sand.u32 %s119, 1
          %s492 = scalar_lea.vmem [#allocation5], %s491
          %493 = dma.done %s490, 16
        $region52: #{tpu_custom_call.1} parent=47 // pred_fallthru
          _
      $region48: #{tpu_custom_call.1} parent=5 // pred_fallthru
        _
    $region6: #{tpu_custom_call.1} parent=1 // loop_footer
      %s20 = sadd.s32 1, %s16
    $region7: #{tpu_custom_call.1} parent=1 // loop_footer_branch
      %15 = sbr.rel target = $region3
    $region8: #{tpu_custom_call.1} parent=1 // loop_exit
      _
    %494 = vsyncpa [#allocation3], 1
    %s495 = scalar_lea.sflag [#allocation3], 1
    %496 = vsyncpa %s495, 1
    %497 = vsyncpa [#allocation4], 1
    %s498 = scalar_lea.sflag [#allocation4], 1
    %499 = vsyncpa %s498, 1

</llo_original>
